<compile_context>
chip_gen: v6e
topology: v6e:2x2x1
jax: 0.10.0
libtpu: 0.0.40
codegen_flags: <defaults>
</compile_context>

<pallas_src>
import jax
import jax.numpy as jnp
from jax.experimental import pallas as pl
from jax.experimental.pallas import tpu as pltpu


# ----------------------------- kernel ----------------------------------------

def _swish_kernel(x_ref, o_ref):
    # Elementwise Swish: y = x * sigmoid(x).  f32 compute (EUP exp + VPU mul),
    # cast back to the output dtype.
    x = x_ref[...].astype(jnp.float32)
    o_ref[...] = (x * jax.nn.sigmoid(x)).astype(o_ref.dtype)


# ----------------------------- helpers ----------------------------------------

def _round_up(a: int, b: int) -> int:
    return ((a + b - 1) // b) * b


def _sublane(dtype) -> int:
    # Native sublane tile per dtype width (f32:8, bf16/f16:16, int8/fp8:32).
    return {1: 32, 2: 16, 4: 8}.get(jnp.dtype(dtype).itemsize, 8)


_TARGET_BLOCK_BYTES = 4 * 1024 * 1024   # per buffer; 4x => 16 MiB double-buffered total
_VMEM_LIMIT_BYTES = 32 * 1024 * 1024    # > v5e 16 MiB default, == v6e/v7x default


def _swish_2d(x2, block_rows: int, lanes: int, grid_rows: int):
    return pl.pallas_call(
        _swish_kernel,
        out_shape=jax.ShapeDtypeStruct(x2.shape, x2.dtype),
        grid=(grid_rows,),
        in_specs=[pl.BlockSpec((block_rows, lanes), lambda i: (i, 0))],
        out_specs=pl.BlockSpec((block_rows, lanes), lambda i: (i, 0)),
        compiler_params=pltpu.CompilerParams(
            dimension_semantics=("parallel",),
            vmem_limit_bytes=_VMEM_LIMIT_BYTES,
        ),
    )(x2)


# ----------------------------- wrapper ----------------------------------------

def swish(x):
    """Elementwise Swish (x * sigmoid(x)) via a Pallas TPU kernel.

    Works for any input shape.  The array is viewed lane-dense as
    (rows, lanes) with lanes a multiple of 128 (no copy in the common case),
    processed in sublane-aligned row-blocks over a 1-D grid with Pallas'
    automatic double-buffering, then reshaped back.
    """
    orig_shape = x.shape
    dtype = x.dtype
    n = x.size
    if n == 0:
        return x

    sub = _sublane(dtype)
    itemsize = jnp.dtype(dtype).itemsize

    # ---- pick a lane count that needs no padding, if possible ----
    lanes = None
    last = orig_shape[-1] if x.ndim >= 1 else 0
    if last % 128 == 0 and 128 <= last <= 16384 and (n // last) >= sub:
        lanes = last                      # natural trailing dim, pure reshape
    else:
        for cand in (1024, 512, 256, 128):
            if n % cand == 0 and (n // cand) >= sub:
                lanes = cand
                break

    needs_pad = lanes is None
    if needs_pad:
        # Awkward size: pad the flat array only up to a multiple of `lanes`
        # (and at least `sub` rows).  Zero padding is safe: swish(0) == 0.
        lanes = 512
        rows = max(pl.cdiv(n, lanes), sub)
        flat = jnp.pad(x.reshape(-1), (0, rows * lanes - n))
        x2 = flat.reshape(rows, lanes)
    else:
        rows = n // lanes
        x2 = x.reshape(rows, lanes)

    # ---- block sizing: ~4 MiB per buffer, sublane-aligned, >=2 blocks when possible ----
    max_block_rows = max(sub, (_TARGET_BLOCK_BYTES // (lanes * itemsize)) // sub * sub)
    block_rows = max(sub, min(max_block_rows, _round_up(pl.cdiv(rows, 2), sub)))
    grid_rows = pl.cdiv(rows, block_rows)   # partial last block handled by Pallas masking

    out2 = _swish_2d(x2, block_rows, lanes, grid_rows)

    if needs_pad:
        return out2.reshape(-1)[:n].reshape(orig_shape)
    return out2.reshape(orig_shape)


# ----------------------------- main -------------------------------------------

if __name__ == "__main__":
    def _ref(v):
        v32 = v.astype(jnp.float32)
        return (v32 * jax.nn.sigmoid(v32)).astype(v.dtype)

    key = jax.random.PRNGKey(0)

    # 1) Small feature-map shape consistent with the module (no pad path).
    x = jax.random.normal(key, (2, 4, 16, 16), dtype=jnp.float32)
    y = jax.block_until_ready(swish(x))
    assert y.shape == x.shape and y.dtype == x.dtype
    assert jnp.allclose(y, _ref(x), atol=1e-6, rtol=1e-6)

    # 2) Lane-aligned trailing dim, multi-block grid (fast path, grid >= 2).
    x_fast = jax.random.normal(jax.random.PRNGKey(1), (4, 4, 1024), dtype=jnp.float32)
    y_fast = jax.block_until_ready(swish(x_fast))
    assert jnp.allclose(y_fast, _ref(x_fast), atol=1e-6, rtol=1e-6)

    # 3) Lane-aligned trailing dim with a partial (masked) last row-block.
    x_part = jax.random.normal(jax.random.PRNGKey(2), (5, 3, 1024), dtype=jnp.float32)
    y_part = jax.block_until_ready(swish(x_part))
    assert jnp.allclose(y_part, _ref(x_part), atol=1e-6, rtol=1e-6)

    # 4) Awkward bf16 shape (pad path, 16-sublane alignment).
    x_bf = jax.random.normal(jax.random.PRNGKey(3), (3, 5, 7, 11), dtype=jnp.bfloat16)
    y_bf = jax.block_until_ready(swish(x_bf))
    assert y_bf.shape == x_bf.shape and y_bf.dtype == jnp.bfloat16
    assert jnp.allclose(y_bf.astype(jnp.float32), _ref(x_bf).astype(jnp.float32),
                        atol=2e-2, rtol=2e-2)

    print("KERNEL_OK")
</pallas_src>

<mosaic_0001>
module attributes {stable_mosaic.version = 11 : i64} {
  func.func @_swish_kernel(%arg0: i32, %arg1: memref<8x256xf32, #tpu.memory_space<vmem>>, %arg2: memref<8x256xf32, #tpu.memory_space<vmem>>) attributes {dimension_semantics = [#tpu.dimension_semantics<parallel>], iteration_bounds = array<i64: 1>, scalar_prefetch = 0 : i64, scratch_operands = 0 : i64, tpu.core_type = #tpu.core_type<tc>, window_params = [{transform_indices = @transform_0, window_bounds = array<i64: 8, 256>}, {transform_indices = @transform_1, window_bounds = array<i64: 8, 256>}]} {
    %c0 = arith.constant 0 : index
    %c0_0 = arith.constant 0 : index
    %0 = vector.load %arg1[%c0, %c0_0] : memref<8x256xf32, #tpu.memory_space<vmem>>, vector<8x256xf32>
    %1 = arith.negf %0 : vector<8x256xf32>
    %2 = math.exp %1 : vector<8x256xf32>
    %cst = arith.constant 1.000000e+00 : f32
    %3 = vector.broadcast %cst : f32 to vector<8x256xf32>
    %4 = arith.addf %3, %2 : vector<8x256xf32>
    %5 = arith.divf %3, %4 : vector<8x256xf32>
    %6 = arith.mulf %0, %5 : vector<8x256xf32>
    %c0_1 = arith.constant 0 : index
    %c0_2 = arith.constant 0 : index
    %7 = vector.load %arg2[%c0_1, %c0_2] : memref<8x256xf32, #tpu.memory_space<vmem>>, vector<8x256xf32>
    tpu.vector_store %arg2[%c0_1, %c0_2], %6 {strides = array<i32>} : memref<8x256xf32, #tpu.memory_space<vmem>>, vector<8x256xf32>,
    return
  }
  func.func @transform_0(%arg0: i32) -> (i32, i32) {
    %c0_i32 = arith.constant 0 : i32
    %c0_i32_0 = arith.constant 0 : i32
    return %arg0, %c0_i32 : i32, i32
  }
  func.func @transform_1(%arg0: i32) -> (i32, i32) {
    %c0_i32 = arith.constant 0 : i32
    %c0_i32_0 = arith.constant 0 : i32
    return %arg0, %c0_i32 : i32, i32
  }
}

</mosaic_0001>

<llo_original>
// kernel: tpu_custom_call.1
$region0: #{tpu_custom_call.1}
  #allocation0 [shape = 'u32[]', space=smem, size = 0x4, offset = 0x4, fixed_abs, tag = 'smem constant byte address 0x4 - core index']
  #allocation1 [shape = 'u32[144,128]{1,0:T(1,128)}', space=vmem, size = 0x12000, scoped, tag = 'internal scratch']
  %s0 = inlined_call_operand.hbm [shape: f32[8,256], index: 0, kind: input, shape index: {}]
  %s1 = inlined_call_operand.hbm [shape: f32[8,256], index: 1, kind: output, shape index: {}]
  %s2 = sld [smem:[#allocation0]]
  $region18: #{tpu_custom_call.1} parent=0
    _
  %s4 = ssub.s32 1, %s2
  %s5 = scalar_select 0, %s4, %s2
  $region1: #{tpu_custom_call.1} parent=0
    #allocation2 [shape = 'u8[8192]{0}', space=vmem, size = 0x2000, scoped, tag = 'input window, operand 0, single buffered']
    #allocation3 [shape = 's32[1]{0}', space=sflag, size = 0x4, scoped, tag = 'scoped memory for tpu_custom_call.1']
    #allocation4 [shape = 's32[1]{0}', space=sflag, size = 0x4, scoped, tag = 'scoped memory for tpu_custom_call.1']
    #allocation5 [shape = 'u8[8192]{0}', space=vmem, size = 0x2000, scoped, tag = 'output window, operand 0, single buffered']
    %6 = vsyncpa [#allocation3], 0
    %7 = vsyncpa [#allocation4], 0
    // Predicated region
    $region2: #{tpu_custom_call.1} parent=1 // pred_check
      _
    $region3: #{tpu_custom_call.1} parent=1 // pred_check_branch
      %9 = sbr.rel (0) target = $region5
    $region4: #{tpu_custom_call.1} parent=1 // pred_region
      %s11 = ssub.s32 256, 256
      %12 = vsyncadd [#allocation3], %s11
      %s14 = sshll.u32 [#allocation2], 4
      %s15 = int_to_ptr.vmem [resolvable:$true] %s14
      %17 = dma.hbm_to_vmem [thread:$0]  %s0, 256, %s15, [#allocation3]
    $region5: #{tpu_custom_call.1} parent=1 // pred_fallthru
      _
    // Predicated region
    $region6: #{tpu_custom_call.1} parent=1 // pred_check
      _
    $region7: #{tpu_custom_call.1} parent=1 // pred_check_branch
      %19 = sbr.rel (0) target = $region9
    $region8: #{tpu_custom_call.1} parent=1 // pred_region
      %20 = dma.done [#allocation3], 256
    $region9: #{tpu_custom_call.1} parent=1 // pred_fallthru
      _
    %v21 = vld [vmem:[#allocation2] sm:$0xff]
    %v22 = vld [vmem:[#allocation2 + $0x8] sm:$0xff]
    %v23 = vxor.u32 %v21, 2147483648
    %v24 = vxor.u32 %v22, 2147483648
    %v25 = vmul.f32 %v23, 1.442695
    %v26 = vpow.pop %v25
    %v27 = vmul.f32 %v24, 1.442695
    %v28 = vpow.pop %v27
    %v29 = vadd.f32 %v26, 1.0
    %v30 = vadd.f32 %v28, 1.0
    %v31 = vrcp.pop %v29
    %v32 = vmul.f32 1.0, %v31
    %v33 = vrcp.pop %v30
    %v34 = vmul.f32 1.0, %v33
    %v35 = vmul.f32 %v21, %v32
    %v36 = vmul.f32 %v22, %v34
    %37 = vst [vmem:[#allocation5] sm:$0xff] %v35
    %38 = vst [vmem:[#allocation5 + $0x8] sm:$0xff] %v36
    // Predicated region
    $region10: #{tpu_custom_call.1} parent=1 // pred_check
      _
    $region11: #{tpu_custom_call.1} parent=1 // pred_check_branch
      %40 = sbr.rel (0) target = $region13
    $region12: #{tpu_custom_call.1} parent=1 // pred_region
      %s42 = ssub.s32 256, 256
      %43 = vsyncadd [#allocation4], %s42
      %s45 = sshll.u32 [#allocation5], 4
      %s46 = int_to_ptr.vmem [resolvable:$true] %s45
      %48 = dma.vmem_to_hbm [thread:$0]  %s46, 256, %s1, [#allocation4]
    $region13: #{tpu_custom_call.1} parent=1 // pred_fallthru
      _
    // Predicated region
    $region14: #{tpu_custom_call.1} parent=1 // pred_check
      _
    $region15: #{tpu_custom_call.1} parent=1 // pred_check_branch
      %50 = sbr.rel (0) target = $region17
    $region16: #{tpu_custom_call.1} parent=1 // pred_region
      %51 = dma.done [#allocation4], 256
    $region17: #{tpu_custom_call.1} parent=1 // pred_fallthru
      _
    %52 = vsyncpa [#allocation3], 1
    %53 = vsyncpa [#allocation4], 1

</llo_original>
